<compile_context>
chip_gen: v7x
topology: tpu7x:2x2x1
jax: 0.10.0
libtpu: 0.0.40
codegen_flags: <defaults>
</compile_context>

<pallas_src>
import jax
import jax.numpy as jnp
from jax.experimental import pallas as pl
from jax.experimental.pallas import tpu as pltpu


def _srl(x, n):
    """Logical right shift on int32: arithmetic shift, then mask sign-extension."""
    return (x >> n) & jnp.int32((1 << (32 - n)) - 1)


def _region_detector_kernel(seed_ref, s0_ref, s1_ref, out_ref):
    R, L = out_ref.shape          # (round_up(2B, 8), 128)

    row = jax.lax.broadcasted_iota(jnp.int32, (R, L), 0)
    lane = jax.lax.broadcasted_iota(jnp.int32, (R, L), 1)

    # ---- features: deterministic uniform [-1, 1) from an int32 hash ----------
    # NOTE: relies on XLA's defined int32 wraparound (two's complement) for the
    # multiplies — this is the foundation of the RNG.
    seed = seed_ref[0]                                              # SMEM scalar
    x = (row * jnp.int32(L) + lane + jnp.int32(1)) ^ (seed * jnp.int32(-1640531527))
    # lowbias32 finalizer (int32 mul wraps == uint32 mul low bits).
    x = x ^ _srl(x, 16)
    x = x * jnp.int32(2146121773)                                   # 0x7FEB352D
    x = x ^ _srl(x, 15)
    x = x * jnp.int32(-2073254261)                                  # 0x846CA68B
    x = x ^ _srl(x, 16)
    # Exponent-bit trick: 23 mantissa bits | exponent(2.0) -> f32 in [2, 4),
    # then subtract 3.0 to land in [-1, 1).  No int->float convert, single VALU op.
    fbits = (x & jnp.int32(0x007FFFFF)) | jnp.int32(0x40000000)
    u24 = jax.lax.bitcast_convert_type(fbits, jnp.float32)
    feat = u24 - jnp.float32(3.0)

    # ---- fused slab: lanes 0..9 features, lanes 10..13 box cols, rest pad ----
    out = jnp.where(lane < 10, feat, jnp.float32(0.0))              # box cols 0,1 = 0
    # Per-row size columns (R,1) broadcast along lanes: exactly two selects,
    # independent of batch size.
    out = jnp.where(lane == 12, s0_ref[...], out)                   # box col 2 = sizes[b, 0]
    out = jnp.where(lane == 13, s1_ref[...], out)                   # box col 3 = sizes[b, 1]
    out_ref[...] = out


def _round_up(n, m):
    return ((n + m - 1) // m) * m


@jax.jit
def _region_detector_impl(sizes, seed_arr):
    """Jitted forward: cast + column build + pallas_call + slab slicing, all fused."""
    B = sizes.shape[0]
    R = max(8, _round_up(2 * B, 8))                  # sublane-aligned row count
    pad = R - 2 * B

    sizes_f32 = sizes.astype(jnp.float32)
    # Rows 2b and 2b+1 belong to image b.
    s0_col = jnp.pad(jnp.repeat(sizes_f32[:, 0], 2), (0, pad)).reshape(R, 1)
    s1_col = jnp.pad(jnp.repeat(sizes_f32[:, 1], 2), (0, pad)).reshape(R, 1)

    slab = pl.pallas_call(
        _region_detector_kernel,
        out_shape=jax.ShapeDtypeStruct((R, 128), jnp.float32),
        in_specs=[
            pl.BlockSpec(memory_space=pltpu.MemorySpace.SMEM),   # seed scalar (1-D)
            pl.BlockSpec(memory_space=pltpu.MemorySpace.VMEM),   # s0 column (R,1)
            pl.BlockSpec(memory_space=pltpu.MemorySpace.VMEM),   # s1 column (R,1)
        ],
        out_specs=pl.BlockSpec(memory_space=pltpu.MemorySpace.VMEM),
    )(seed_arr, s0_col, s1_col)

    feats = slab[: 2 * B, :10].reshape(B, 2, 10)
    boxes = slab[: 2 * B, 10:14].reshape(B, 2, 4)
    return feats, boxes


def region_detector_forward(images, sizes, image_features=None, *, seed=0):
    """Pallas-backed region-detector forward.

    images: (B, C, H, W) — only the batch dim is used (as in the PyTorch module).
    sizes:  (B, 2) int — per-image sizes.
    Returns stacked (B, 2, 10) features and (B, 2, 4) boxes (f32); callers that
    want the module's List[Tensor] convention can simply `list(...)` each.
    """
    del images, image_features                       # batch dim comes from `sizes`
    seed_arr = jnp.asarray([seed], dtype=jnp.int32)  # traced device scalar
    return _region_detector_impl(jnp.asarray(sizes), seed_arr)


if __name__ == "__main__":
    key = jax.random.PRNGKey(0)
    B, C, H, W = 2, 4, 16, 16
    images = jax.random.normal(key, (B, C, H, W), dtype=jnp.float32)
    sizes = jnp.array([[16, 16], [12, 14]], dtype=jnp.int32)
    image_features = {"backbone": jax.random.normal(key, (B, 8, 4, 4), dtype=jnp.float32)}

    feats, boxes = region_detector_forward(images, sizes, image_features, seed=0)
    feats, boxes = jax.block_until_ready((feats, boxes))

    # Sanity checks on the module's semantics.
    assert feats.shape == (B, 2, 10) and feats.dtype == jnp.float32
    assert boxes.shape == (B, 2, 4) and boxes.dtype == jnp.float32
    assert bool(jnp.all(boxes[:, :, :2] == 0.0))
    assert bool(jnp.all(boxes[:, :, 2] == sizes[:, 0:1].astype(jnp.float32)))
    assert bool(jnp.all(boxes[:, :, 3] == sizes[:, 1:2].astype(jnp.float32)))
    assert bool(jnp.all(jnp.abs(feats) <= 1.0))
    assert float(jnp.std(feats)) > 0.0

    # Determinism in seed.
    feats2, boxes2 = region_detector_forward(images, sizes, image_features, seed=0)
    assert bool(jnp.all(feats == feats2)) and bool(jnp.all(boxes == boxes2))
    feats3, _ = region_detector_forward(images, sizes, image_features, seed=1)
    assert not bool(jnp.all(feats == feats3))

    # List[Tensor]-style access matching RegionDetectorOutput(features, boxes).
    features_list, boxes_list = list(feats), list(boxes)
    assert len(features_list) == B and len(boxes_list) == B
    assert features_list[0].shape == (2, 10) and boxes_list[0].shape == (2, 4)

    print("KERNEL_OK")
</pallas_src>

<mosaic_0001>
module attributes {stable_mosaic.version = 11 : i64} {
  func.func @_region_detector_kernel(%arg0: memref<1xi32, #tpu.memory_space<smem>>, %arg1: memref<8x1xf32, #tpu.memory_space<vmem>>, %arg2: memref<8x1xf32, #tpu.memory_space<vmem>>, %arg3: memref<8x128xf32, #tpu.memory_space<vmem>>) attributes {dimension_semantics = [], scalar_prefetch = 0 : i64, scratch_operands = 0 : i64, tpu.core_type = #tpu.core_type<tc>} {
    %0 = tpu.iota {dimensions = array<i32: 0>} : vector<8x128xi32>
    %1 = tpu.iota {dimensions = array<i32: 1>} : vector<8x128xi32>
    %c0 = arith.constant 0 : index
    %2 = memref.load %arg0[%c0] : memref<1xi32, #tpu.memory_space<smem>>
    %c128_i32 = arith.constant 128 : i32
    %3 = vector.broadcast %c128_i32 : i32 to vector<8x128xi32>
    %4 = arith.muli %0, %3 : vector<8x128xi32>
    %5 = arith.addi %4, %1 : vector<8x128xi32>
    %c1_i32 = arith.constant 1 : i32
    %6 = vector.broadcast %c1_i32 : i32 to vector<8x128xi32>
    %7 = arith.addi %5, %6 : vector<8x128xi32>
    %c-1640531527_i32 = arith.constant -1640531527 : i32
    %8 = arith.muli %2, %c-1640531527_i32 : i32
    %9 = vector.broadcast %8 : i32 to vector<8x128xi32>
    %10 = arith.xori %7, %9 : vector<8x128xi32>
    %c16_i32 = arith.constant 16 : i32
    %11 = vector.broadcast %c16_i32 : i32 to vector<8x128xi32>
    %12 = arith.shrsi %10, %11 : vector<8x128xi32>
    %c65535_i32 = arith.constant 65535 : i32
    %13 = vector.broadcast %c65535_i32 : i32 to vector<8x128xi32>
    %14 = arith.andi %12, %13 : vector<8x128xi32>
    %15 = arith.xori %10, %14 : vector<8x128xi32>
    %c2146121773_i32 = arith.constant 2146121773 : i32
    %16 = vector.broadcast %c2146121773_i32 : i32 to vector<8x128xi32>
    %17 = arith.muli %15, %16 : vector<8x128xi32>
    %c15_i32 = arith.constant 15 : i32
    %18 = vector.broadcast %c15_i32 : i32 to vector<8x128xi32>
    %19 = arith.shrsi %17, %18 : vector<8x128xi32>
    %c131071_i32 = arith.constant 131071 : i32
    %20 = vector.broadcast %c131071_i32 : i32 to vector<8x128xi32>
    %21 = arith.andi %19, %20 : vector<8x128xi32>
    %22 = arith.xori %17, %21 : vector<8x128xi32>
    %c-2073254261_i32 = arith.constant -2073254261 : i32
    %23 = vector.broadcast %c-2073254261_i32 : i32 to vector<8x128xi32>
    %24 = arith.muli %22, %23 : vector<8x128xi32>
    %c16_i32_0 = arith.constant 16 : i32
    %25 = vector.broadcast %c16_i32_0 : i32 to vector<8x128xi32>
    %26 = arith.shrsi %24, %25 : vector<8x128xi32>
    %c65535_i32_1 = arith.constant 65535 : i32
    %27 = vector.broadcast %c65535_i32_1 : i32 to vector<8x128xi32>
    %28 = arith.andi %26, %27 : vector<8x128xi32>
    %29 = arith.xori %24, %28 : vector<8x128xi32>
    %c8388607_i32 = arith.constant 8388607 : i32
    %30 = vector.broadcast %c8388607_i32 : i32 to vector<8x128xi32>
    %31 = arith.andi %29, %30 : vector<8x128xi32>
    %c1073741824_i32 = arith.constant 1073741824 : i32
    %32 = vector.broadcast %c1073741824_i32 : i32 to vector<8x128xi32>
    %33 = arith.ori %31, %32 : vector<8x128xi32>
    %34 = tpu.bitcast %33 : vector<8x128xi32> -> vector<8x128xf32>
    %cst = arith.constant 3.000000e+00 : f32
    %35 = vector.broadcast %cst : f32 to vector<8x128xf32>
    %36 = arith.subf %34, %35 : vector<8x128xf32>
    %c10_i32 = arith.constant 10 : i32
    %37 = vector.broadcast %c10_i32 : i32 to vector<8x128xi32>
    %38 = arith.cmpi slt, %1, %37 : vector<8x128xi32>
    %cst_2 = arith.constant 0.000000e+00 : f32
    %39 = vector.broadcast %cst_2 : f32 to vector<8x128xf32>
    %40 = arith.select %38, %36, %39 : vector<8x128xi1>, vector<8x128xf32>
    %c12_i32 = arith.constant 12 : i32
    %41 = vector.broadcast %c12_i32 : i32 to vector<8x128xi32>
    %42 = arith.cmpi eq, %1, %41 : vector<8x128xi32>
    %c0_3 = arith.constant 0 : index
    %c0_4 = arith.constant 0 : index
    %43 = vector.load %arg1[%c0_3, %c0_4] : memref<8x1xf32, #tpu.memory_space<vmem>>, vector<8x1xf32>
    %44 = vector.shape_cast %43 : vector<8x1xf32> to vector<8x1xf32>
    %45 = vector.broadcast %44 : vector<8x1xf32> to vector<8x128xf32>
    %46 = arith.select %42, %45, %40 : vector<8x128xi1>, vector<8x128xf32>
    %c13_i32 = arith.constant 13 : i32
    %47 = vector.broadcast %c13_i32 : i32 to vector<8x128xi32>
    %48 = arith.cmpi eq, %1, %47 : vector<8x128xi32>
    %c0_5 = arith.constant 0 : index
    %c0_6 = arith.constant 0 : index
    %49 = vector.load %arg2[%c0_5, %c0_6] : memref<8x1xf32, #tpu.memory_space<vmem>>, vector<8x1xf32>
    %50 = vector.shape_cast %49 : vector<8x1xf32> to vector<8x1xf32>
    %51 = vector.broadcast %50 : vector<8x1xf32> to vector<8x128xf32>
    %52 = arith.select %48, %51, %46 : vector<8x128xi1>, vector<8x128xf32>
    %c0_7 = arith.constant 0 : index
    %c0_8 = arith.constant 0 : index
    %53 = vector.load %arg3[%c0_7, %c0_8] : memref<8x128xf32, #tpu.memory_space<vmem>>, vector<8x128xf32>
    tpu.vector_store %arg3[%c0_7, %c0_8], %52 {strides = array<i32>} : memref<8x128xf32, #tpu.memory_space<vmem>>, vector<8x128xf32>,
    return
  }
}

</mosaic_0001>

<llo_original>
// kernel: _region_detector_impl.1
$region0: #{_region_detector_impl.1}
  #allocation0 [shape = 'u32[]', space=smem, size = 0x4, offset = 0x4, fixed_abs, tag = 'smem constant byte address 0x4 - core index']
  #allocation1 [shape = 'u32[144,128]{1,0:T(1,128)}', space=vmem, size = 0x12000, scoped, tag = 'internal scratch']
  #allocation2 [shape = 's32[1]{0:T(128)S(6)}', space=smem, size = 0x200, scoped, tag = 'scoped memory for _region_detector_impl.1']
  %s0 = inlined_call_operand.<no memory space> [shape: s32[1], index: 0, kind: input, shape index: {}]
  %s1 = inlined_call_operand.vmem [shape: f32[8,1], index: 1, kind: input, shape index: {}]
  %s2 = inlined_call_operand.vmem [shape: f32[8,1], index: 2, kind: input, shape index: {}]
  %s3 = inlined_call_operand.vmem [shape: f32[8,128], index: 3, kind: output, shape index: {}]
  %s4 = sld [smem:[#allocation0]]
  $region22: #{_region_detector_impl.1} parent=0
    _
  %s6 = ssub.s32 1, %s4
  %s7 = scalar_select 0, %s6, %s4
  %8 = sst [smem:[#allocation2]] %s0
  // Predicated region
  $region2: #{_region_detector_impl.1} parent=0 // pred_check
    _
  $region3: #{_region_detector_impl.1} parent=0 // pred_check_branch
    %10 = sbr.rel (0) target = $region5
  $region4: #{_region_detector_impl.1} parent=0 // pred_region
    _
  $region5: #{_region_detector_impl.1} parent=0 // pred_fallthru
    _
  // Predicated region
  $region6: #{_region_detector_impl.1} parent=0 // pred_check
    _
  $region7: #{_region_detector_impl.1} parent=0 // pred_check_branch
    %12 = sbr.rel (0) target = $region9
  $region8: #{_region_detector_impl.1} parent=0 // pred_region
    _
  $region9: #{_region_detector_impl.1} parent=0 // pred_fallthru
    _
  // Predicated region
  $region10: #{_region_detector_impl.1} parent=0 // pred_check
    _
  $region11: #{_region_detector_impl.1} parent=0 // pred_check_branch
    %14 = sbr.rel (0) target = $region13
  $region12: #{_region_detector_impl.1} parent=0 // pred_region
    _
  $region13: #{_region_detector_impl.1} parent=0 // pred_fallthru
    _
  %v15 = vlaneseq
  %v16 = vshrl.u32 %v15, 7
  %v17 = vlaneseq
  %v18 = vand.u32 %v17, 127
  %s19 = sld [smem:[#allocation2]]
  %v20 = vmul.u32 %v16, 128
  %v21 = vadd.s32 %v20, %v18
  %v22 = vadd.s32 %v21, 1
  %s23 = smul.u32 %s19, 2654435769
  %v24 = vstv %s23
  %v25 = vxor.u32 %v22, %v24
  %v26 = vshra.s32 %v25, 16
  %v27 = vand.u32 %v26, 65535
  %v28 = vxor.u32 %v25, %v27
  %v29 = vmul.u32 %v28, 2146121773
  %v30 = vshra.s32 %v29, 15
  %v31 = vand.u32 %v30, 131071
  %v32 = vxor.u32 %v29, %v31
  %v33 = vmul.u32 %v32, 2221713035
  %v34 = vshra.s32 %v33, 16
  %v35 = vand.u32 %v34, 65535
  %v36 = vxor.u32 %v33, %v35
  %v37 = vand.u32 %v36, 8388607
  %v38 = vor.u32 %v37, 1073741824
  %v40 = vsub.f32 %v38, 3.0
  %vm41 = vcmp.lt.s32.totalorder %v18, 10
  %v42 = vsel %vm41, %v40, 0.0
  %vm43 = vcmp.eq.s32.totalorder %v18, 12
  %v44 = vld [vmem:[%s1] sm:$0xff]
  %46 = vset.pattern.permute.xlu0 0
  %47 = vperm.xlu0 %46, %v44
  %v48 = vpop.permute.xlu0 %47
  %v50 = vsel %vm43, %v48, %v42
  %vm51 = vcmp.eq.s32.totalorder %v18, 13
  %v52 = vld [vmem:[%s2] sm:$0xff]
  %54 = vset.pattern.permute.xlu0 0
  %55 = vperm.xlu0 %54, %v52
  %v56 = vpop.permute.xlu0 %55
  %v58 = vsel %vm51, %v56, %v50
  %59 = vst [vmem:[%s3] sm:$0xff] %v58
  // Predicated region
  $region14: #{_region_detector_impl.1} parent=0 // pred_check
    _
  $region15: #{_region_detector_impl.1} parent=0 // pred_check_branch
    %61 = sbr.rel (0) target = $region17
  $region16: #{_region_detector_impl.1} parent=0 // pred_region
    _
  $region17: #{_region_detector_impl.1} parent=0 // pred_fallthru
    _
  // Predicated region
  $region18: #{_region_detector_impl.1} parent=0 // pred_check
    _
  $region19: #{_region_detector_impl.1} parent=0 // pred_check_branch
    %63 = sbr.rel (0) target = $region21
  $region20: #{_region_detector_impl.1} parent=0 // pred_region
    _
  $region21: #{_region_detector_impl.1} parent=0 // pred_fallthru
    _

</llo_original>
